<compile_context>
chip_gen: v6e
topology: v6e:2x2x1
jax: 0.10.0
libtpu: 0.0.40
codegen_flags: <defaults>
</compile_context>

<pallas_src>
import jax
import jax.numpy as jnp
from jax.experimental import pallas as pl
from jax.experimental.pallas import tpu as pltpu


# ---------------------------------------------------------------------------
# Tiled streaming kernel (row tiles, online column logsumexp, partial outputs)
# ---------------------------------------------------------------------------
def _clip_loss_tiled_kernel(scale_ref, sims_ref, diag_ref, stats_ref,
                            acc_ref, cmax_ref, csum_ref):
    # scale_ref: SMEM (1, 1) f32      -- logit_scale (pre-exp)
    # sims_ref : VMEM (tm, N)         -- row tile of sims (native dtype)
    # diag_ref : VMEM (tm, tm)        -- diagonal block of sims (block index (t, t))
    # stats_ref: VMEM (1, 3, N) f32   -- per-chunk [cmax; csum; acc] written at end
    # acc_ref  : SMEM (1,)   f32      -- accumulates 2*sum(diag) - sum(row_lse)
    # cmax_ref : VMEM (1, N) f32      -- online column max
    # csum_ref : VMEM (1, N) f32      -- online column exp-sum (shifted by cmax)
    c = pl.program_id(0)
    i = pl.program_id(1)
    tiles_per_chunk = pl.num_programs(1)
    tm, n = sims_ref.shape
    t = c * tiles_per_chunk + i
    row0 = t * tm
    ragged = (n % tm) != 0          # trace-time: last tile may be partial

    scale = jnp.exp(scale_ref[0, 0])

    @pl.when(i == 0)
    def _():
        acc_ref[0] = jnp.float32(0.0)
        cmax_ref[...] = jnp.full(cmax_ref.shape, -jnp.inf, jnp.float32)
        csum_ref[...] = jnp.zeros(csum_ref.shape, jnp.float32)

    logits = sims_ref[...].astype(jnp.float32) * scale          # (tm, N) f32
    if ragged:
        r_local = jax.lax.broadcasted_iota(jnp.int32, (tm, 1), 0)
        row_valid = (row0 + r_local) < n                          # (tm, 1) bool
        # Neutralize out-of-range rows (may contain arbitrary bits); select is
        # NaN-safe.
        logits = jnp.where(row_valid, logits, jnp.float32(0.0))

    # --- row logsumexp (the only per-element exp in the kernel) ---
    row_max = jnp.max(logits, axis=1, keepdims=True)              # (tm, 1)
    e = jnp.exp(logits - row_max)                                  # (tm, N)
    row_lse = jnp.log(jnp.sum(e, axis=1, keepdims=True)) + row_max

    if ragged:
        row_max_m = jnp.where(row_valid, row_max, -jnp.inf)
        row_lse_sum = jnp.sum(jnp.where(row_valid, row_lse, jnp.float32(0.0)))
        tile_cmax = jnp.max(jnp.where(row_valid, logits, -jnp.inf),
                            axis=0, keepdims=True)                 # (1, N)
    else:
        row_max_m = row_max
        row_lse_sum = jnp.sum(row_lse)
        tile_cmax = jnp.max(logits, axis=0, keepdims=True)          # (1, N)

    # --- diagonal contribution from the small (tm, tm) diagonal block ---
    dblk = diag_ref[...].astype(jnp.float32) * scale
    rr = jax.lax.broadcasted_iota(jnp.int32, (tm, tm), 0)
    cc = jax.lax.broadcasted_iota(jnp.int32, (tm, tm), 1)
    on_diag = rr == cc
    if ragged:
        on_diag = jnp.logical_and(on_diag, (row0 + rr) < n)
    diag_sum = jnp.sum(jnp.where(on_diag, dblk, jnp.float32(0.0)))

    # --- online column logsumexp, reusing E with a shared per-tile shift ---
    # col_part[c] = sum_r exp(logits[r,c] - tile_max); invalid rows get w == 0.
    tile_max = jnp.max(row_max_m)                                   # scalar
    w = jnp.exp(row_max_m - tile_max)                               # (tm, 1)
    col_part = jnp.sum(e * w, axis=0, keepdims=True)                # (1, N)

    new_cmax = jnp.maximum(cmax_ref[...], tile_cmax)
    csum_ref[...] = (csum_ref[...] * jnp.exp(cmax_ref[...] - new_cmax)
                     + col_part * jnp.exp(tile_max - new_cmax))
    cmax_ref[...] = new_cmax

    acc_ref[0] = acc_ref[0] + jnp.float32(2.0) * diag_sum - row_lse_sum

    @pl.when(i == tiles_per_chunk - 1)
    def _():
        stats_ref[0, 0:1, :] = cmax_ref[...]
        stats_ref[0, 1:2, :] = csum_ref[...]
        stats_ref[0, 2:3, :] = jnp.full((1, n), acc_ref[0], jnp.float32)


def _vmem_limit_bytes(tm, n, itemsize):
    tile_in = tm * n * itemsize            # row tile, double-buffered
    diag_in = tm * tm * itemsize           # diag block, double-buffered
    work = 4 * tm * n * 4                  # f32 temporaries (logits, E, E*w, slack)
    fixed = 2 * (3 * n * 4) + 2 * (n * 4) + (2 << 20)
    est = 2 * tile_in + 2 * diag_in + work + fixed
    # Stay within v7x's smaller VMEM (64 MiB physical / 32 MiB scoped default).
    return int(min(max(est, 16 << 20), 32 << 20))


def _clip_loss_tiled(sims, scale, tile_rows):
    n = sims.shape[0]
    tm = tile_rows
    num_tiles = pl.cdiv(n, tm)
    n_chunks = 2 if (num_tiles % 2 == 0 and num_tiles >= 2) else 1
    tiles_per_chunk = num_tiles // n_chunks

    stats = pl.pallas_call(
        _clip_loss_tiled_kernel,
        out_shape=jax.ShapeDtypeStruct((n_chunks, 3, n), jnp.float32),
        grid_spec=pltpu.PrefetchScalarGridSpec(
            num_scalar_prefetch=0,
            grid=(n_chunks, tiles_per_chunk),
            in_specs=[
                pl.BlockSpec(memory_space=pltpu.MemorySpace.SMEM),        # logit_scale
                pl.BlockSpec((tm, n),
                             lambda c, i: (c * tiles_per_chunk + i, 0)),  # row tile
                pl.BlockSpec((tm, tm),
                             lambda c, i: (c * tiles_per_chunk + i,
                                           c * tiles_per_chunk + i)),     # diag block
            ],
            out_specs=pl.BlockSpec((1, 3, n), lambda c, i: (c, 0, 0)),
            scratch_shapes=[
                pltpu.SMEM((1,), jnp.float32),     # 2*sum(diag) - sum(row_lse)
                pltpu.VMEM((1, n), jnp.float32),   # online column max
                pltpu.VMEM((1, n), jnp.float32),   # online column exp-sum
            ],
        ),
        compiler_params=pltpu.CompilerParams(
            dimension_semantics=("parallel", "arbitrary"),
            vmem_limit_bytes=_vmem_limit_bytes(tm, n, sims.dtype.itemsize),
        ),
    )(scale, sims, sims)

    # Merge per-chunk partials (tiny (n_chunks, N) arrays).
    cmax = stats[:, 0, :]                     # (C, N)
    csum = stats[:, 1, :]                     # (C, N)
    acc = jnp.sum(stats[:, 2, 0])             # scalar
    gmax = jnp.max(cmax, axis=0)              # (N,)
    total_csum = jnp.sum(csum * jnp.exp(cmax - gmax), axis=0)
    col_lse = jnp.log(jnp.maximum(total_csum, jnp.float32(1e-37))) + gmax
    total = acc - jnp.sum(col_lse)
    return -total / (jnp.float32(2.0) * n)


# ---------------------------------------------------------------------------
# Small-N single-block kernel (full array fits comfortably in VMEM)
# ---------------------------------------------------------------------------
def _clip_loss_small_kernel(scale_ref, sims_ref, out_ref):
    scale = jnp.exp(scale_ref[0, 0])
    logits = sims_ref[...].astype(jnp.float32) * scale
    n = logits.shape[0]

    row_max = jnp.max(logits, axis=1, keepdims=True)
    row_lse = jnp.log(jnp.sum(jnp.exp(logits - row_max), axis=1, keepdims=True)) + row_max
    col_max = jnp.max(logits, axis=0, keepdims=True)
    col_lse = jnp.log(jnp.sum(jnp.exp(logits - col_max), axis=0, keepdims=True)) + col_max

    r = jax.lax.broadcasted_iota(jnp.int32, logits.shape, 0)
    c = jax.lax.broadcasted_iota(jnp.int32, logits.shape, 1)
    diag_sum = jnp.sum(jnp.where(r == c, logits, jnp.float32(0.0)))

    total = jnp.float32(2.0) * diag_sum - jnp.sum(row_lse) - jnp.sum(col_lse)
    out_ref[0, 0] = -total / (jnp.float32(2.0) * jnp.float32(n))


def _clip_loss_single_block(sims, scale):
    out = pl.pallas_call(
        _clip_loss_small_kernel,
        out_shape=jax.ShapeDtypeStruct((1, 1), jnp.float32),
        in_specs=[
            pl.BlockSpec(memory_space=pltpu.MemorySpace.SMEM),   # logit_scale
            pl.BlockSpec(memory_space=pltpu.MemorySpace.VMEM),   # sims (whole array)
        ],
        out_specs=pl.BlockSpec(memory_space=pltpu.MemorySpace.SMEM),
    )(scale, sims)
    return out[0, 0]


# ---------------------------------------------------------------------------
# Dispatch
# ---------------------------------------------------------------------------
def _pick_tile_rows(n, target_f32_bytes=4 << 20):
    """Row-tile height: multiple of 128, ~4 MiB of f32 working tile, capped at 512."""
    bytes_per_row = 4 * n
    tm = max(128, (target_f32_bytes // bytes_per_row) // 128 * 128)
    tm = min(tm, 512)
    tm = min(tm, ((n + 127) // 128) * 128)
    return int(tm)


def clip_loss(sims: jax.Array, logit_scale: jax.Array, *,
              tile_rows=None, min_tiled_n=256) -> jax.Array:
    """Pallas implementation of CLIPLoss.forward(sims, logit_scale)."""
    n = sims.shape[0]
    assert sims.ndim == 2 and sims.shape[1] == n, "sims must be square [N, N]"
    # Keep the native dtype (bf16 stays bf16 in HBM); the kernel casts per tile.
    scale = jnp.reshape(jnp.asarray(logit_scale, jnp.float32), (1, 1))

    if n >= min_tiled_n:
        tm = tile_rows if tile_rows is not None else _pick_tile_rows(n)
        assert tm % 128 == 0, "tile_rows must be a multiple of 128"
        return _clip_loss_tiled(sims, scale, tm)
    return _clip_loss_single_block(sims, scale)


# ---------------------------------------------------------------------------
# Reference + test
# ---------------------------------------------------------------------------
def _clip_loss_ref(sims, logit_scale):
    """Pure-JAX reference mirroring the PyTorch module."""
    logits = sims.astype(jnp.float32) * jnp.exp(logit_scale)
    t2v = jax.nn.log_softmax(logits, axis=1)
    v2t = jax.nn.log_softmax(logits, axis=0)
    t2v_loss = -jnp.mean(jnp.diag(t2v))
    v2t_loss = -jnp.mean(jnp.diag(v2t))
    return (t2v_loss + v2t_loss) / 2.0


if __name__ == "__main__":
    key = jax.random.PRNGKey(0)
    k1, k2, k3 = jax.random.split(key, 3)

    # CLIP-style learnable log temperature (scalar), deterministic init
    logit_scale = jnp.asarray(jnp.log(1.0 / 0.07), dtype=jnp.float32)

    # --- tiny-N path (single full-array block) ---
    n0 = 8
    s0 = jax.random.normal(k1, (n0, n0), dtype=jnp.float32)
    l0 = clip_loss(s0, logit_scale)
    jax.block_until_ready(l0)
    r0 = _clip_loss_ref(s0, logit_scale)
    assert jnp.allclose(l0, r0, rtol=2e-4, atol=2e-3), (l0, r0)

    # --- tiled path, ragged N (masked last tile), 2 chunks x 2 tiles ---
    n1 = 503
    s1 = jax.random.normal(k2, (n1, n1), dtype=jnp.float32)
    l1 = clip_loss(s1, logit_scale, tile_rows=128)
    jax.block_until_ready(l1)
    r1 = _clip_loss_ref(s1, logit_scale)
    assert jnp.allclose(l1, r1, rtol=2e-4, atol=2e-3), (l1, r1)

    # --- tiled path, bf16 input (native-dtype streaming) ---
    n2 = 256
    s2 = jax.random.normal(k3, (n2, n2), dtype=jnp.float32).astype(jnp.bfloat16)
    l2 = clip_loss(s2, logit_scale, tile_rows=128)
    jax.block_until_ready(l2)
    r2 = _clip_loss_ref(s2, logit_scale)
    assert jnp.allclose(l2, r2, rtol=1e-3, atol=5e-3), (l2, r2)

    print("KERNEL_OK")
</pallas_src>

<mosaic_0001>
module attributes {stable_mosaic.version = 11 : i64} {
  func.func @_clip_loss_small_kernel(%arg0: memref<1x1xf32, #tpu.memory_space<smem>>, %arg1: memref<8x8xf32, #tpu.memory_space<vmem>>, %arg2: memref<1x1xf32, #tpu.memory_space<smem>>) attributes {dimension_semantics = [], scalar_prefetch = 0 : i64, scratch_operands = 0 : i64, tpu.core_type = #tpu.core_type<tc>} {
    %c0 = arith.constant 0 : index
    %c0_0 = arith.constant 0 : index
    %0 = memref.load %arg0[%c0, %c0_0] : memref<1x1xf32, #tpu.memory_space<smem>>
    %1 = math.exp %0 : f32
    %c0_1 = arith.constant 0 : index
    %c0_2 = arith.constant 0 : index
    %2 = vector.load %arg1[%c0_1, %c0_2] : memref<8x8xf32, #tpu.memory_space<vmem>>, vector<8x8xf32>
    %3 = vector.broadcast %1 : f32 to vector<8x8xf32>
    %4 = arith.mulf %2, %3 : vector<8x8xf32>
    %cst = arith.constant dense<0xFF800000> : vector<8xf32>
    %5 = vector.multi_reduction <maximumf>, %4, %cst [1] : vector<8x8xf32> to vector<8xf32>
    %6 = vector.shape_cast %5 : vector<8xf32> to vector<8x1xf32>
    %7 = vector.broadcast %6 : vector<8x1xf32> to vector<8x8xf32>
    %8 = arith.subf %4, %7 : vector<8x8xf32>
    %9 = math.exp %8 : vector<8x8xf32>
    %cst_3 = arith.constant dense<0.000000e+00> : vector<8xf32>
    %10 = vector.multi_reduction <add>, %9, %cst_3 [1] : vector<8x8xf32> to vector<8xf32>
    %11 = vector.shape_cast %10 : vector<8xf32> to vector<8x1xf32>
    %12 = math.log %11 : vector<8x1xf32>
    %13 = arith.addf %12, %6 : vector<8x1xf32>
    %cst_4 = arith.constant dense<0xFF800000> : vector<8xf32>
    %14 = vector.multi_reduction <maximumf>, %4, %cst_4 [0] : vector<8x8xf32> to vector<8xf32>
    %15 = vector.shape_cast %14 : vector<8xf32> to vector<1x8xf32>
    %16 = vector.broadcast %15 : vector<1x8xf32> to vector<8x8xf32>
    %17 = arith.subf %4, %16 : vector<8x8xf32>
    %18 = math.exp %17 : vector<8x8xf32>
    %cst_5 = arith.constant dense<0.000000e+00> : vector<8xf32>
    %19 = vector.multi_reduction <add>, %18, %cst_5 [0] : vector<8x8xf32> to vector<8xf32>
    %20 = vector.shape_cast %19 : vector<8xf32> to vector<1x8xf32>
    %21 = math.log %20 : vector<1x8xf32>
    %22 = arith.addf %21, %15 : vector<1x8xf32>
    %23 = tpu.iota {dimensions = array<i32: 0>} : vector<8x8xi32>
    %24 = tpu.iota {dimensions = array<i32: 1>} : vector<8x8xi32>
    %25 = arith.cmpi eq, %23, %24 : vector<8x8xi32>
    %cst_6 = arith.constant 0.000000e+00 : f32
    %26 = vector.broadcast %cst_6 : f32 to vector<8x8xf32>
    %27 = arith.select %25, %4, %26 : vector<8x8xi1>, vector<8x8xf32>
    %28 = vector.shape_cast %27 : vector<8x8xf32> to vector<1x8x8xf32>
    %cst_7 = arith.constant dense<0.000000e+00> : vector<1xf32>
    %29 = vector.multi_reduction <add>, %28, %cst_7 [1, 2] : vector<1x8x8xf32> to vector<1xf32>
    %30 = vector.shape_cast %29 : vector<1xf32> to vector<1x1x1xf32>
    %31 = vector.extract %30[0, 0, 0] : f32 from vector<1x1x1xf32>
    %cst_8 = arith.constant 2.000000e+00 : f32
    %32 = arith.mulf %cst_8, %31 : f32
    %33 = vector.shape_cast %13 : vector<8x1xf32> to vector<1x8x1xf32>
    %cst_9 = arith.constant dense<0.000000e+00> : vector<1xf32>
    %34 = vector.multi_reduction <add>, %33, %cst_9 [1, 2] : vector<1x8x1xf32> to vector<1xf32>
    %35 = vector.shape_cast %34 : vector<1xf32> to vector<1x1x1xf32>
    %36 = vector.extract %35[0, 0, 0] : f32 from vector<1x1x1xf32>
    %37 = arith.subf %32, %36 : f32
    %38 = vector.shape_cast %22 : vector<1x8xf32> to vector<1x1x8xf32>
    %cst_10 = arith.constant dense<0.000000e+00> : vector<1xf32>
    %39 = vector.multi_reduction <add>, %38, %cst_10 [1, 2] : vector<1x1x8xf32> to vector<1xf32>
    %40 = vector.shape_cast %39 : vector<1xf32> to vector<1x1x1xf32>
    %41 = vector.extract %40[0, 0, 0] : f32 from vector<1x1x1xf32>
    %42 = arith.subf %37, %41 : f32
    %cst_11 = arith.constant 0.000000e+00 : f32
    %43 = arith.subf %cst_11, %42 : f32
    %cst_12 = arith.constant 2.000000e+00 : f32
    %cst_13 = arith.constant 8.000000e+00 : f32
    %44 = arith.mulf %cst_12, %cst_13 : f32
    %45 = arith.divf %43, %44 : f32
    %c0_14 = arith.constant 0 : index
    %c0_15 = arith.constant 0 : index
    %46 = memref.load %arg2[%c0_14, %c0_15] : memref<1x1xf32, #tpu.memory_space<smem>>
    memref.store %45, %arg2[%c0_14, %c0_15] : memref<1x1xf32, #tpu.memory_space<smem>>
    return
  }
}

</mosaic_0001>

<llo_original>
// kernel: tpu_custom_call.1
$region0: #{tpu_custom_call.1}
  #allocation0 [shape = 'u32[]', space=smem, size = 0x4, offset = 0x4, fixed_abs, tag = 'smem constant byte address 0x4 - core index']
  #allocation1 [shape = 'u32[144,128]{1,0:T(1,128)}', space=vmem, size = 0x12000, scoped, tag = 'internal scratch']
  #allocation2 [shape = 'f32[1,1]{1,0:T(1,128)S(6)}', space=smem, size = 0x200, scoped, tag = 'scoped memory for tpu_custom_call.1']
  %s0 = inlined_call_operand.<no memory space> [shape: f32[1,1], index: 0, kind: input, shape index: {}]
  %s1 = inlined_call_operand.hbm [shape: f32[8,8], index: 1, kind: input, shape index: {}]
  %s2 = inlined_call_operand.hbm [shape: f32[1,1], index: 2, kind: output, shape index: {}]
  %s3 = sld [smem:[#allocation0]]
  $region22: #{tpu_custom_call.1} parent=0
    _
  %s5 = ssub.s32 1, %s3
  %s6 = scalar_select 0, %s5, %s3
  %7 = sst [smem:[#allocation2]] %s0
  $region1: #{tpu_custom_call.1} parent=0
    #allocation3 [shape = 'u8[4096]{0}', space=vmem, size = 0x1000, scoped, tag = 'input window, operand 1, single buffered']
    #allocation4 [shape = 's32[1]{0}', space=sflag, size = 0x4, scoped, tag = 'scoped memory for tpu_custom_call.1']
    #allocation5 [shape = 's32[1]{0}', space=sflag, size = 0x4, scoped, tag = 'scoped memory for tpu_custom_call.1']
    #allocation6 [shape = 'u8[512]{0}', space=smem, size = 0x200, scoped, tag = 'output window, operand 0, single buffered']
    %8 = vsyncpa [#allocation4], 0
    %9 = vsyncpa [#allocation5], 0
    // Predicated region
    $region2: #{tpu_custom_call.1} parent=1 // pred_check
      _
    $region3: #{tpu_custom_call.1} parent=1 // pred_check_branch
      %11 = sbr.rel (0) target = $region5
    $region4: #{tpu_custom_call.1} parent=1 // pred_region
      _
    $region5: #{tpu_custom_call.1} parent=1 // pred_fallthru
      _
    // Predicated region
    $region6: #{tpu_custom_call.1} parent=1 // pred_check
      _
    $region7: #{tpu_custom_call.1} parent=1 // pred_check_branch
      %13 = sbr.rel (0) target = $region9
    $region8: #{tpu_custom_call.1} parent=1 // pred_region
      %s15 = ssub.s32 128, 128
      %16 = vsyncadd [#allocation4], %s15
      %s18 = sshll.u32 [#allocation3], 4
      %s19 = int_to_ptr.vmem [resolvable:$true] %s18
      %21 = dma.hbm_to_vmem [thread:$0]  %s1, 128, %s19, [#allocation4]
    $region9: #{tpu_custom_call.1} parent=1 // pred_fallthru
      _
    // Predicated region
    $region10: #{tpu_custom_call.1} parent=1 // pred_check
      _
    $region11: #{tpu_custom_call.1} parent=1 // pred_check_branch
      %23 = sbr.rel (0) target = $region13
    $region12: #{tpu_custom_call.1} parent=1 // pred_region
      %24 = dma.done [#allocation4], 128
    $region13: #{tpu_custom_call.1} parent=1 // pred_fallthru
      _
    %s25 = sld [smem:[#allocation2]]
    %v26 = vstv %s25
    %v27 = vmul.f32 %v26, 1.442695
    %v28 = vpow.pop %v27
    %s29 = vtos %v28
    %v30 = vld [vmem:[#allocation3] sm:$0xff]
    %v31 = vstv %s29
    %v32 = vmul.f32 %v30, %v31
    %vm33 = vcmask 64512
    %v34 = vsel %vm33, %v32, -inf
    %35 = vmax.xlane.f32.xlu0 %v34
    %v36 = vpop.xlane.xlu0 %35
    %v37 = vsub.f32 %v32, %v36
    %v38 = vmul.f32 %v37, 1.442695
    %v39 = vpow.pop %v38
    %v40 = vsel %vm33, %v39, 0.0
    %41 = vadd.xlane.f32.xlu0 %v40
    %v42 = vpop.xlane.xlu0 %41
    %v43 = vlog2.pop %v42
    %v44 = vmul.f32 %v43, 0.6931472
    %v45 = vadd.f32 %v44, %v36
    %v46 = vrot.slane %v34, 4
    %v47 = vmax.f32 %v34, %v46
    %v48 = vrot.slane %v47, 2
    %v49 = vmax.f32 %v47, %v48
    %v50 = vrot.slane %v49, 1
    %v51 = vmax.f32 %v49, %v50
    %v52 = vsub.f32 %v32, %v51
    %v53 = vmul.f32 %v52, 1.442695
    %v54 = vpow.pop %v53
    %v55 = vsel %vm33, %v54, 0.0
    %v56 = vrot.slane %v55, 4
    %v57 = vadd.f32 %v55, %v56
    %v58 = vrot.slane %v57, 2
    %v59 = vadd.f32 %v57, %v58
    %v60 = vrot.slane %v59, 1
    %v61 = vadd.f32 %v59, %v60
    %v62 = vlog2.pop %v61
    %v63 = vmul.f32 %v62, 0.6931472
    %v64 = vadd.f32 %v63, %v51
    %v65 = vlaneseq
    %v66 = vshrl.u32 %v65, 7
    %v67 = vlaneseq
    %v68 = vand.u32 %v67, 127
    %vm69 = vcmp.eq.s32.totalorder %v66, %v68
    %v70 = vsel %vm69, %v32, 0.0
    %v71 = vsel %vm33, %v70, 0.0
    %72 = vadd.xlane.f32.xlu0 %v71
    %v73 = vpop.xlane.xlu0 %72
    %v74 = vrot.slane %v73, 4
    %v75 = vadd.f32 %v73, %v74
    %v76 = vrot.slane %v75, 2
    %v77 = vadd.f32 %v75, %v76
    %v78 = vrot.slane %v77, 1
    %v79 = vadd.f32 %v77, %v78
    %s80 = vtos %v79
    %s81 = smul.f32 %s80, 2.0
    %vm82 = vcmask 7168
    %v83 = vsel %vm82, %v45, 0.0
    %84 = vadd.xlane.f32.xlu0 %v83
    %v85 = vpop.xlane.xlu0 %84
    %v86 = vrot.slane %v85, 4
    %v87 = vadd.f32 %v85, %v86
    %v88 = vrot.slane %v87, 2
    %v89 = vadd.f32 %v87, %v88
    %v90 = vrot.slane %v89, 1
    %v91 = vadd.f32 %v89, %v90
    %s92 = vtos %v91
    %s93 = ssub.f32 %s81, %s92
    %vm94 = vcmask 57344
    %v95 = vsel %vm94, %v64, 0.0
    %96 = vadd.xlane.f32.xlu0 %v95
    %v97 = vpop.xlane.xlu0 %96
    %v98 = vrot.slane %v97, 4
    %v99 = vadd.f32 %v97, %v98
    %v100 = vrot.slane %v99, 2
    %v101 = vadd.f32 %v99, %v100
    %v102 = vrot.slane %v101, 1
    %v103 = vadd.f32 %v101, %v102
    %s104 = vtos %v103
    %s105 = ssub.f32 %s93, %s104
    %s106 = ssub.f32 0.0, %s105
    %v107 = vrcp.pop 16.0
    %s108 = vtos %v107
    %s109 = smul.f32 %s106, %s108
    %s110 = scalar_lea.smem [#allocation6], 0
    %111 = sst [smem:[%s110]] %s109
    // Predicated region
    $region14: #{tpu_custom_call.1} parent=1 // pred_check
      _
    $region15: #{tpu_custom_call.1} parent=1 // pred_check_branch
      %113 = sbr.rel (0) target = $region17
    $region16: #{tpu_custom_call.1} parent=1 // pred_region
      %s115 = ssub.s32 16, 16
      %116 = vsyncadd [#allocation5], %s115
      %119 = dma.smem_to_hbm [#allocation6], 16, %s2, [#allocation5]
    $region17: #{tpu_custom_call.1} parent=1 // pred_fallthru
      _
    // Predicated region
    $region18: #{tpu_custom_call.1} parent=1 // pred_check
      _
    $region19: #{tpu_custom_call.1} parent=1 // pred_check_branch
      %121 = sbr.rel (0) target = $region21
    $region20: #{tpu_custom_call.1} parent=1 // pred_region
      %122 = dma.done [#allocation5], 16
    $region21: #{tpu_custom_call.1} parent=1 // pred_fallthru
      _
    %123 = sfence
    %124 = vsyncpa [#allocation4], 1
    %125 = vsyncpa [#allocation5], 1

</llo_original>
